<compile_context>
chip_gen: v5e
topology: v5e:2x2
jax: 0.10.0
libtpu: 0.0.40
codegen_flags: <defaults>
</compile_context>

<pallas_src>
import functools

import jax
import jax.numpy as jnp
from jax.experimental import pallas as pl
from jax.experimental.pallas import tpu as pltpu


# ----------------------------- Pallas kernel -------------------------------

def _conv_gap_head_kernel(x_ref, wc_ref, bc_ref, mask_ref, wh_ref, bh_ref,
                          o_ref, col_ref, *, wp, lout):
    """Fused 3x3 conv (single K=36 im2col matmul) + bias + ReLU + GAP + head.

    Grid: (B,)  -- one whole image per step, batch axis "parallel".
      x_ref   : (1, Cin, Lbuf) bf16   flattened zero-padded image (+lane slack)
      wc_ref  : (Cout, 9*Cin)  f32    conv weight, columns in (kh,kw,c) order
      bc_ref  : (Cout, 1)      f32    conv bias (broadcast over lanes)
      mask_ref: (1, Lout)      f32    1.0 on valid output pixels, 0.0 on the
                                      2 wrap-around junk columns per row
      wh_ref  : (NCp, Cout)    f32    head weight^T, pre-scaled by 1/(H*W)
      bh_ref  : (NCp, 1)       f32    head bias (padded to NCp)
      o_ref   : (1, NCp, 1)    f32    logits column for this batch element
      col_ref : (9*Cin, Lout)  f32    im2col scratch (spatial on lanes)
    """
    cin = x_ref.shape[1]

    # Build im2col with 9 static lane-shifted slab copies:
    #   col[k*Cin + c, p] = x_pad[c, p + kh*Wp + kw],  k = kh*3 + kw
    for kh in range(3):
        for kw in range(3):
            k = kh * 3 + kw
            s = kh * wp + kw
            col_ref[k * cin:(k + 1) * cin, :] = (
                x_ref[0, :, s:s + lout].astype(jnp.float32))

    # One MXU matmul: (Cout, 36) @ (36, Lout) -> (Cout, Lout); spatial lane-dense.
    conv = jnp.dot(wc_ref[...], col_ref[...],
                   preferred_element_type=jnp.float32)
    act = jnp.maximum(conv + bc_ref[...], 0.0)          # bias + ReLU (f32)

    # Masked global-average pool (the 1/(H*W) mean is folded into wh_ref).
    pooled = jnp.sum(act * mask_ref[...], axis=1, keepdims=True)   # (Cout, 1)

    # Classifier head: (NCp, Cout) @ (Cout, 1) + (NCp, 1).
    # NOTE: output is a tiny (NCp, 1) column (B*NCp*4 bytes total); the masked
    # partial store is negligible, so no lane-dense relayout is done.
    o_ref[0] = jnp.dot(wh_ref[...], pooled,
                       preferred_element_type=jnp.float32) + bh_ref[...]


# ----------------------------- JAX wrapper ---------------------------------

def _round_up(x, m):
    return ((x + m - 1) // m) * m


def img_classifier_forward(x_nchw, params):
    """Forward pass. x_nchw: [B, Cin, H, W] f32 -> logits [B, num_classes] f32."""
    w_conv, b_conv, w_head, b_head = (params["w_conv"], params["b_conv"],
                                      params["w_head"], params["b_head"])
    B, Cin, H, W = x_nchw.shape
    Cout = w_conv.shape[-1]
    NC = w_head.shape[-1]

    Hp, Wp = H + 2, W + 2
    Lout = H * Wp                           # conv output slots (2 junk cols/row)
    Lbuf = _round_up(Hp * Wp + 2, 128)      # flattened padded image + tap slack

    # Keep NCHW (no transpose); one fused pad + flatten + bf16 pass over x.
    xp = jnp.pad(x_nchw, ((0, 0), (0, 0), (1, 1), (1, 1)))     # [B, Cin, Hp, Wp]
    xf = xp.reshape(B, Cin, Hp * Wp)
    xf = jnp.pad(xf, ((0, 0), (0, 0), (0, Lbuf - Hp * Wp)))
    xf = xf.astype(jnp.bfloat16)                               # halve HBM bytes

    # Weights stay f32 (only the image is stored bf16).
    wc = w_conv.T.astype(jnp.float32)                          # (Cout, 9*Cin)
    bc = b_conv.reshape(Cout, 1).astype(jnp.float32)

    NCp = _round_up(max(NC, 8), 8)
    wh = jnp.zeros((NCp, Cout), jnp.float32).at[:NC].set(
        (w_head / float(H * W)).T.astype(jnp.float32))         # fold GAP mean
    bh = jnp.zeros((NCp, 1), jnp.float32).at[:NC, 0].set(
        b_head.astype(jnp.float32))

    # Valid-pixel mask over the flattened padded rows (w < W within each row).
    mask = ((jnp.arange(Lout) % Wp) < W).astype(jnp.float32).reshape(1, Lout)

    # Explicit VMEM budget (portable to v7x's 64 MiB physical VMEM).
    est_vmem = (2 * Cin * Lbuf * 2          # double-buffered bf16 image block
                + (9 * Cin) * Lout * 4      # im2col scratch (f32)
                + 4 * Cout * Lout * 4       # conv/act/pool working values
                + (2 << 20))                # weights, bias, mask, misc
    vmem_limit = int(min(48 << 20, max(8 << 20, est_vmem)))

    kernel = functools.partial(_conv_gap_head_kernel, wp=Wp, lout=Lout)

    out = pl.pallas_call(
        kernel,
        out_shape=jax.ShapeDtypeStruct((B, NCp, 1), jnp.float32),
        grid_spec=pltpu.PrefetchScalarGridSpec(
            num_scalar_prefetch=0,
            grid=(B,),
            in_specs=[
                pl.BlockSpec((1, Cin, Lbuf), lambda b: (b, 0, 0)),
                pl.BlockSpec((Cout, 9 * Cin), lambda b: (0, 0)),
                pl.BlockSpec((Cout, 1), lambda b: (0, 0)),
                pl.BlockSpec((1, Lout), lambda b: (0, 0)),
                pl.BlockSpec((NCp, Cout), lambda b: (0, 0)),
                pl.BlockSpec((NCp, 1), lambda b: (0, 0)),
            ],
            out_specs=pl.BlockSpec((1, NCp, 1), lambda b: (b, 0, 0)),
            scratch_shapes=[pltpu.VMEM((9 * Cin, Lout), jnp.float32)],
        ),
        compiler_params=pltpu.CompilerParams(
            dimension_semantics=("parallel",),
            vmem_limit_bytes=vmem_limit),
    )(xf, wc, bc, mask, wh, bh)

    return out[:, :NC, 0]


# ----------------------------- reference & init ----------------------------

def reference_forward(x_nchw, params):
    """Pure-JAX f32 reference of the same representative model."""
    B, Cin, H, W = x_nchw.shape
    x = jnp.transpose(x_nchw, (0, 2, 3, 1))
    xp = jnp.pad(x, ((0, 0), (1, 1), (1, 1), (0, 0)))
    patches = jnp.concatenate(
        [xp[:, kh:kh + H, kw:kw + W, :] for kh in range(3) for kw in range(3)],
        axis=-1)                                              # [B, H, W, 9*Cin]
    conv = jnp.einsum("bhwk,kc->bhwc", patches, params["w_conv"]) + params["b_conv"]
    act = jnp.maximum(conv, 0.0)
    pooled = jnp.mean(act, axis=(1, 2))                       # [B, Cout]
    return pooled @ params["w_head"] + params["b_head"]


def init_params(key, cin=4, cout=32, num_classes=10):
    """Deterministic synthetic parameters (no checkpoint load)."""
    k1, k2, k3, k4 = jax.random.split(key, 4)
    # conv weight stored pre-flattened in im2col order: [(kh,kw,Cin), Cout]
    w_conv = jax.random.normal(k1, (9 * cin, cout), jnp.float32) * 0.05
    b_conv = jax.random.normal(k2, (cout,), jnp.float32) * 0.01
    w_head = jax.random.normal(k3, (cout, num_classes), jnp.float32) * 0.05
    b_head = jax.random.normal(k4, (num_classes,), jnp.float32) * 0.01
    return {"w_conv": w_conv, "b_conv": b_conv,
            "w_head": w_head, "b_head": b_head}


if __name__ == "__main__":
    B, Cin, H, W = 2, 4, 16, 16
    num_classes = 10

    key = jax.random.PRNGKey(0)
    kx, kp = jax.random.split(key)
    x = jax.random.normal(kx, (B, Cin, H, W), jnp.float32)
    params = init_params(kp, cin=Cin, cout=32, num_classes=num_classes)

    fwd = jax.jit(img_classifier_forward)
    logits = jax.block_until_ready(fwd(x, params))

    assert logits.shape == (B, num_classes)
    assert logits.dtype == jnp.float32

    ref = reference_forward(x, params)
    assert jnp.allclose(logits, ref, rtol=2e-2, atol=2e-2), (logits, ref)

    print("KERNEL_OK")
</pallas_src>

<mosaic_0001>
module attributes {stable_mosaic.version = 11 : i64} {
  func.func @_conv_gap_head_kernel(%arg0: i32, %arg1: memref<1x4x384xbf16, #tpu.memory_space<vmem>>, %arg2: memref<32x36xf32, #tpu.memory_space<vmem>>, %arg3: memref<32x1xf32, #tpu.memory_space<vmem>>, %arg4: memref<1x288xf32, #tpu.memory_space<vmem>>, %arg5: memref<16x32xf32, #tpu.memory_space<vmem>>, %arg6: memref<16x1xf32, #tpu.memory_space<vmem>>, %arg7: memref<1x16x1xf32, #tpu.memory_space<vmem>>, %arg8: memref<36x288xf32, #tpu.memory_space<vmem>>) attributes {dimension_semantics = [#tpu.dimension_semantics<parallel>], iteration_bounds = array<i64: 2>, scalar_prefetch = 0 : i64, scratch_operands = 1 : i64, tpu.core_type = #tpu.core_type<tc>, window_params = [{transform_indices = @transform_0, window_bounds = array<i64: 1, 4, 384>}, {pipeline_mode = #tpu.pipeline_mode<synchronous>, transform_indices = @transform_1, window_bounds = array<i64: 32, 36>}, {pipeline_mode = #tpu.pipeline_mode<synchronous>, transform_indices = @transform_2, window_bounds = array<i64: 32, 1>}, {pipeline_mode = #tpu.pipeline_mode<synchronous>, transform_indices = @transform_3, window_bounds = array<i64: 1, 288>}, {pipeline_mode = #tpu.pipeline_mode<synchronous>, transform_indices = @transform_4, window_bounds = array<i64: 16, 32>}, {pipeline_mode = #tpu.pipeline_mode<synchronous>, transform_indices = @transform_5, window_bounds = array<i64: 16, 1>}, {transform_indices = @transform_6, window_bounds = array<i64: 1, 16, 1>}]} {
    %c0 = arith.constant 0 : index
    %c0_0 = arith.constant 0 : index
    %c0_1 = arith.constant 0 : index
    %0 = vector.load %arg1[%c0, %c0_0, %c0_1] : memref<1x4x384xbf16, #tpu.memory_space<vmem>>, vector<1x4x288xbf16>
    %1 = vector.shape_cast %0 : vector<1x4x288xbf16> to vector<4x288xbf16>
    %2 = arith.extf %1 : vector<4x288xbf16> to vector<4x288xf32>
    %c0_2 = arith.constant 0 : index
    %c0_3 = arith.constant 0 : index
    %3 = vector.load %arg8[%c0_2, %c0_3] : memref<36x288xf32, #tpu.memory_space<vmem>>, vector<4x288xf32>
    tpu.vector_store %arg8[%c0_2, %c0_3], %2 {strides = array<i32>} : memref<36x288xf32, #tpu.memory_space<vmem>>, vector<4x288xf32>,
    %c0_4 = arith.constant 0 : index
    %c0_5 = arith.constant 0 : index
    %c1 = arith.constant 1 : index
    %4 = vector.load %arg1[%c0_4, %c0_5, %c1] : memref<1x4x384xbf16, #tpu.memory_space<vmem>>, vector<1x4x288xbf16>
    %5 = vector.shape_cast %4 : vector<1x4x288xbf16> to vector<4x288xbf16>
    %6 = arith.extf %5 : vector<4x288xbf16> to vector<4x288xf32>
    %c4 = arith.constant 4 : index
    %c0_6 = arith.constant 0 : index
    %7 = vector.load %arg8[%c4, %c0_6] : memref<36x288xf32, #tpu.memory_space<vmem>>, vector<4x288xf32>
    tpu.vector_store %arg8[%c4, %c0_6], %6 {strides = array<i32>} : memref<36x288xf32, #tpu.memory_space<vmem>>, vector<4x288xf32>,
    %c0_7 = arith.constant 0 : index
    %c0_8 = arith.constant 0 : index
    %c2 = arith.constant 2 : index
    %8 = vector.load %arg1[%c0_7, %c0_8, %c2] : memref<1x4x384xbf16, #tpu.memory_space<vmem>>, vector<1x4x288xbf16>
    %9 = vector.shape_cast %8 : vector<1x4x288xbf16> to vector<4x288xbf16>
    %10 = arith.extf %9 : vector<4x288xbf16> to vector<4x288xf32>
    %c8 = arith.constant 8 : index
    %c0_9 = arith.constant 0 : index
    %11 = vector.load %arg8[%c8, %c0_9] : memref<36x288xf32, #tpu.memory_space<vmem>>, vector<4x288xf32>
    tpu.vector_store %arg8[%c8, %c0_9], %10 {strides = array<i32>} : memref<36x288xf32, #tpu.memory_space<vmem>>, vector<4x288xf32>,
    %c0_10 = arith.constant 0 : index
    %c0_11 = arith.constant 0 : index
    %c18 = arith.constant 18 : index
    %12 = vector.load %arg1[%c0_10, %c0_11, %c18] : memref<1x4x384xbf16, #tpu.memory_space<vmem>>, vector<1x4x288xbf16>
    %13 = vector.shape_cast %12 : vector<1x4x288xbf16> to vector<4x288xbf16>
    %14 = arith.extf %13 : vector<4x288xbf16> to vector<4x288xf32>
    %c12 = arith.constant 12 : index
    %c0_12 = arith.constant 0 : index
    %15 = vector.load %arg8[%c12, %c0_12] : memref<36x288xf32, #tpu.memory_space<vmem>>, vector<4x288xf32>
    tpu.vector_store %arg8[%c12, %c0_12], %14 {strides = array<i32>} : memref<36x288xf32, #tpu.memory_space<vmem>>, vector<4x288xf32>,
    %c0_13 = arith.constant 0 : index
    %c0_14 = arith.constant 0 : index
    %c19 = arith.constant 19 : index
    %16 = vector.load %arg1[%c0_13, %c0_14, %c19] : memref<1x4x384xbf16, #tpu.memory_space<vmem>>, vector<1x4x288xbf16>
    %17 = vector.shape_cast %16 : vector<1x4x288xbf16> to vector<4x288xbf16>
    %18 = arith.extf %17 : vector<4x288xbf16> to vector<4x288xf32>
    %c16 = arith.constant 16 : index
    %c0_15 = arith.constant 0 : index
    %19 = vector.load %arg8[%c16, %c0_15] : memref<36x288xf32, #tpu.memory_space<vmem>>, vector<4x288xf32>
    tpu.vector_store %arg8[%c16, %c0_15], %18 {strides = array<i32>} : memref<36x288xf32, #tpu.memory_space<vmem>>, vector<4x288xf32>,
    %c0_16 = arith.constant 0 : index
    %c0_17 = arith.constant 0 : index
    %c20 = arith.constant 20 : index
    %20 = vector.load %arg1[%c0_16, %c0_17, %c20] : memref<1x4x384xbf16, #tpu.memory_space<vmem>>, vector<1x4x288xbf16>
    %21 = vector.shape_cast %20 : vector<1x4x288xbf16> to vector<4x288xbf16>
    %22 = arith.extf %21 : vector<4x288xbf16> to vector<4x288xf32>
    %c20_18 = arith.constant 20 : index
    %c0_19 = arith.constant 0 : index
    %23 = vector.load %arg8[%c20_18, %c0_19] : memref<36x288xf32, #tpu.memory_space<vmem>>, vector<4x288xf32>
    tpu.vector_store %arg8[%c20_18, %c0_19], %22 {strides = array<i32>} : memref<36x288xf32, #tpu.memory_space<vmem>>, vector<4x288xf32>,
    %c0_20 = arith.constant 0 : index
    %c0_21 = arith.constant 0 : index
    %c36 = arith.constant 36 : index
    %24 = vector.load %arg1[%c0_20, %c0_21, %c36] : memref<1x4x384xbf16, #tpu.memory_space<vmem>>, vector<1x4x288xbf16>
    %25 = vector.shape_cast %24 : vector<1x4x288xbf16> to vector<4x288xbf16>
    %26 = arith.extf %25 : vector<4x288xbf16> to vector<4x288xf32>
    %c24 = arith.constant 24 : index
    %c0_22 = arith.constant 0 : index
    %27 = vector.load %arg8[%c24, %c0_22] : memref<36x288xf32, #tpu.memory_space<vmem>>, vector<4x288xf32>
    tpu.vector_store %arg8[%c24, %c0_22], %26 {strides = array<i32>} : memref<36x288xf32, #tpu.memory_space<vmem>>, vector<4x288xf32>,
    %c0_23 = arith.constant 0 : index
    %c0_24 = arith.constant 0 : index
    %c37 = arith.constant 37 : index
    %28 = vector.load %arg1[%c0_23, %c0_24, %c37] : memref<1x4x384xbf16, #tpu.memory_space<vmem>>, vector<1x4x288xbf16>
    %29 = vector.shape_cast %28 : vector<1x4x288xbf16> to vector<4x288xbf16>
    %30 = arith.extf %29 : vector<4x288xbf16> to vector<4x288xf32>
    %c28 = arith.constant 28 : index
    %c0_25 = arith.constant 0 : index
    %31 = vector.load %arg8[%c28, %c0_25] : memref<36x288xf32, #tpu.memory_space<vmem>>, vector<4x288xf32>
    tpu.vector_store %arg8[%c28, %c0_25], %30 {strides = array<i32>} : memref<36x288xf32, #tpu.memory_space<vmem>>, vector<4x288xf32>,
    %c0_26 = arith.constant 0 : index
    %c0_27 = arith.constant 0 : index
    %c38 = arith.constant 38 : index
    %32 = vector.load %arg1[%c0_26, %c0_27, %c38] : memref<1x4x384xbf16, #tpu.memory_space<vmem>>, vector<1x4x288xbf16>
    %33 = vector.shape_cast %32 : vector<1x4x288xbf16> to vector<4x288xbf16>
    %34 = arith.extf %33 : vector<4x288xbf16> to vector<4x288xf32>
    %c32 = arith.constant 32 : index
    %c0_28 = arith.constant 0 : index
    %35 = vector.load %arg8[%c32, %c0_28] : memref<36x288xf32, #tpu.memory_space<vmem>>, vector<4x288xf32>
    tpu.vector_store %arg8[%c32, %c0_28], %34 {strides = array<i32>} : memref<36x288xf32, #tpu.memory_space<vmem>>, vector<4x288xf32>,
    %c0_29 = arith.constant 0 : index
    %c0_30 = arith.constant 0 : index
    %36 = vector.load %arg2[%c0_29, %c0_30] : memref<32x36xf32, #tpu.memory_space<vmem>>, vector<32x36xf32>
    %c0_31 = arith.constant 0 : index
    %c0_32 = arith.constant 0 : index
    %37 = vector.load %arg8[%c0_31, %c0_32] : memref<36x288xf32, #tpu.memory_space<vmem>>, vector<36x288xf32>
    %cst = arith.constant dense<0.000000e+00> : vector<32x288xf32>
    %38 = tpu.matmul %36, %37, %cst {dimension_numbers = #tpu.dot_dimension_numbers<[1], [0], [0], [1], [0, 0, 1, 1], [], []>} : vector<32x36xf32>, vector<36x288xf32>, vector<32x288xf32> -> vector<32x288xf32>
    %c0_33 = arith.constant 0 : index
    %c0_34 = arith.constant 0 : index
    %39 = vector.load %arg3[%c0_33, %c0_34] : memref<32x1xf32, #tpu.memory_space<vmem>>, vector<32x1xf32>
    %40 = vector.broadcast %39 : vector<32x1xf32> to vector<32x288xf32>
    %41 = arith.addf %38, %40 : vector<32x288xf32>
    %cst_35 = arith.constant 0.000000e+00 : f32
    %42 = vector.broadcast %cst_35 : f32 to vector<32x288xf32>
    %43 = arith.maximumf %41, %42 : vector<32x288xf32>
    %c0_36 = arith.constant 0 : index
    %c0_37 = arith.constant 0 : index
    %44 = vector.load %arg4[%c0_36, %c0_37] : memref<1x288xf32, #tpu.memory_space<vmem>>, vector<1x288xf32>
    %45 = vector.broadcast %44 : vector<1x288xf32> to vector<32x288xf32>
    %46 = arith.mulf %43, %45 : vector<32x288xf32>
    %cst_38 = arith.constant dense<0.000000e+00> : vector<32xf32>
    %47 = vector.multi_reduction <add>, %46, %cst_38 [1] : vector<32x288xf32> to vector<32xf32>
    %48 = vector.shape_cast %47 : vector<32xf32> to vector<32x1xf32>
    %c0_39 = arith.constant 0 : index
    %c0_40 = arith.constant 0 : index
    %49 = vector.load %arg5[%c0_39, %c0_40] : memref<16x32xf32, #tpu.memory_space<vmem>>, vector<16x32xf32>
    %cst_41 = arith.constant dense<0.000000e+00> : vector<16x1xf32>
    %50 = tpu.matmul %49, %48, %cst_41 {dimension_numbers = #tpu.dot_dimension_numbers<[1], [0], [0], [1], [0, 0, 1, 1], [], []>} : vector<16x32xf32>, vector<32x1xf32>, vector<16x1xf32> -> vector<16x1xf32>
    %c0_42 = arith.constant 0 : index
    %c0_43 = arith.constant 0 : index
    %51 = vector.load %arg6[%c0_42, %c0_43] : memref<16x1xf32, #tpu.memory_space<vmem>>, vector<16x1xf32>
    %52 = arith.addf %50, %51 : vector<16x1xf32>
    %c0_44 = arith.constant 0 : index
    %c0_45 = arith.constant 0 : index
    %c0_46 = arith.constant 0 : index
    %53 = vector.load %arg7[%c0_44, %c0_45, %c0_46] : memref<1x16x1xf32, #tpu.memory_space<vmem>>, vector<1x16x1xf32>
    %54 = vector.shape_cast %53 : vector<1x16x1xf32> to vector<16x1xf32>
    %55 = vector.shape_cast %52 : vector<16x1xf32> to vector<1x16x1xf32>
    tpu.vector_store %arg7[%c0_44, %c0_45, %c0_46], %55 {strides = array<i32>} : memref<1x16x1xf32, #tpu.memory_space<vmem>>, vector<1x16x1xf32>,
    return
  }
  func.func @transform_0(%arg0: i32) -> (i32, i32, i32) {
    %c0_i32 = arith.constant 0 : i32
    %c0_i32_0 = arith.constant 0 : i32
    %c0_i32_1 = arith.constant 0 : i32
    return %arg0, %c0_i32, %c0_i32_0 : i32, i32, i32
  }
  func.func @transform_1(%arg0: i32) -> (i32, i32) {
    %c0_i32 = arith.constant 0 : i32
    %c0_i32_0 = arith.constant 0 : i32
    %c0_i32_1 = arith.constant 0 : i32
    return %c0_i32, %c0_i32_0 : i32, i32
  }
  func.func @transform_2(%arg0: i32) -> (i32, i32) {
    %c0_i32 = arith.constant 0 : i32
    %c0_i32_0 = arith.constant 0 : i32
    %c0_i32_1 = arith.constant 0 : i32
    return %c0_i32, %c0_i32_0 : i32, i32
  }
  func.func @transform_3(%arg0: i32) -> (i32, i32) {
    %c0_i32 = arith.constant 0 : i32
    %c0_i32_0 = arith.constant 0 : i32
    %c0_i32_1 = arith.constant 0 : i32
    return %c0_i32, %c0_i32_0 : i32, i32
  }
  func.func @transform_4(%arg0: i32) -> (i32, i32) {
    %c0_i32 = arith.constant 0 : i32
    %c0_i32_0 = arith.constant 0 : i32
    %c0_i32_1 = arith.constant 0 : i32
    return %c0_i32, %c0_i32_0 : i32, i32
  }
  func.func @transform_5(%arg0: i32) -> (i32, i32) {
    %c0_i32 = arith.constant 0 : i32
    %c0_i32_0 = arith.constant 0 : i32
    %c0_i32_1 = arith.constant 0 : i32
    return %c0_i32, %c0_i32_0 : i32, i32
  }
  func.func @transform_6(%arg0: i32) -> (i32, i32, i32) {
    %c0_i32 = arith.constant 0 : i32
    %c0_i32_0 = arith.constant 0 : i32
    %c0_i32_1 = arith.constant 0 : i32
    return %arg0, %c0_i32, %c0_i32_0 : i32, i32, i32
  }
}

</mosaic_0001>

<llo_original>
// kernel: img_classifier_forward.1
$region0: #{img_classifier_forward.1}
  #allocation0 [shape = 'u32[]', space=smem, size = 0x4, offset = 0x4, fixed_abs, tag = 'smem constant byte address 0x4 - core index']
  #allocation1 [shape = 'u32[72,128]{1,0:T(1,128)}', space=vmem, size = 0x9000, scoped, tag = 'internal scratch']
  #allocation2 [shape = 'f32[36,288]{1,0:T(8,128)}', space=vmem, size = 0xf000, scoped, tag = 'scratch operand']
  %s0 = inlined_call_operand.vmem [shape: bf16[2,4,384], index: 0, kind: input, shape index: {}]
  %s1 = inlined_call_operand.vmem [shape: f32[32,36], index: 1, kind: input, shape index: {}]
  %s2 = inlined_call_operand.vmem [shape: f32[32,1], index: 2, kind: input, shape index: {}]
  %s3 = inlined_call_operand.vmem [shape: f32[1,288], index: 3, kind: input, shape index: {}]
  %s4 = inlined_call_operand.vmem [shape: f32[16,32], index: 4, kind: input, shape index: {}]
  %s5 = inlined_call_operand.vmem [shape: f32[16,1], index: 5, kind: input, shape index: {}]
  %s6 = inlined_call_operand.vmem [shape: f32[2,16,1], index: 6, kind: output, shape index: {}]
  %s7 = sld [smem:[#allocation0]]
  $region57: #{img_classifier_forward.1} parent=0
    _
  %s9 = ssub.s32 1, %s7
  %s10 = scalar_select 0, %s9, %s7
  loop: start=0, step=1, limit=4
  $region2: #{img_classifier_forward.1} parent=0 // loop_pre_header
    _
  $region3: #{img_classifier_forward.1} parent=0 // loop_header
    %s12 = sphi 0, %s16
    %p13 = scmp.ge.s32.totalorder %s12, 4
    %s22 = sphi 0, %s24
    %s25 = sphi 0, %s22
    %s26 = sphi 0, %s25
    %s42 = sphi 0, %s26
    %s46 = sphi 0, %s46
    %s48 = sphi 0, %s46
    %s49 = sphi 0, %s48
    %s63 = sphi 0, %s49
    %s67 = sphi 0, %s67
    %s69 = sphi 0, %s67
    %s70 = sphi 0, %s69
    %s84 = sphi 0, %s70
    %s88 = sphi 0, %s88
    %s90 = sphi 0, %s88
    %s91 = sphi 0, %s90
    %s105 = sphi 0, %s91
    %s109 = sphi 0, %s109
    %s111 = sphi 0, %s109
    %s112 = sphi 0, %s111
    %s126 = sphi 0, %s112
    %s130 = sphi 0, %s130
    %s132 = sphi 0, %s130
    %s133 = sphi 0, %s132
    %s147 = sphi 0, %s133
    %s153 = sphi 0, %s155
    %s156 = sphi 0, %s153
    %s157 = sphi 0, %s156
    %s173 = sphi 0, %s157
  $region4: #{img_classifier_forward.1} parent=0 // loop_header_branch
    %15 = sbr.rel (%p13) target = $region8
  $region5: #{img_classifier_forward.1} parent=0 // loop_body
    %s17 = ssub.s32 %s12, 1
    %s18 = ssub.s32 %s12, 2
    %s19 = sadd.s32 %s12, 1
    %s20 = ssub.s32 %s12, %s19
    %p21 = scmp.eq.s32.totalorder %s20, 0
    %s23 = sadd.s32 %s22, 1
    %s24 = scalar_select %p21, %s22, %s23
    %p27 = pneg %p21
    %p28 = scmp.eq.s32.totalorder %s12, 1
    %p29 = por %p27, %p28
    %p30 = scmp.ne.s32.totalorder %s22, %s25
    %p31 = scmp.eq.s32.totalorder %s12, 0
    %p32 = por %p30, %p31
    %p33 = scmp.ne.s32.totalorder %s22, %s25
    %p34 = scmp.eq.s32.totalorder %s17, 1
    %p35 = por %p33, %p34
    %p36 = scmp.ne.s32.totalorder %s25, %s26
    %p37 = scmp.eq.s32.totalorder %s17, 0
    %p38 = por %p36, %p37
    %p39 = scmp.ne.s32.totalorder %s25, %s26
    %p40 = scmp.eq.s32.totalorder %s18, 1
    %p41 = por %p39, %p40
    %p43 = scmp.ne.s32.totalorder %s26, %s42
    %p44 = scmp.eq.s32.totalorder %s18, 0
    %p45 = por %p43, %p44
    %s47 = sadd.s32 %s46, 1
    %p50 = scmp.eq.s32.totalorder %s12, 1
    %p51 = scmp.ne.s32.totalorder %s46, %s48
    %p52 = scmp.eq.s32.totalorder %s12, 0
    %p53 = por %p51, %p52
    %p54 = scmp.ne.s32.totalorder %s46, %s48
    %p55 = scmp.eq.s32.totalorder %s17, 1
    %p56 = por %p54, %p55
    %p57 = scmp.ne.s32.totalorder %s48, %s49
    %p58 = scmp.eq.s32.totalorder %s17, 0
    %p59 = por %p57, %p58
    %p60 = scmp.ne.s32.totalorder %s48, %s49
    %p61 = scmp.eq.s32.totalorder %s18, 1
    %p62 = por %p60, %p61
    %p64 = scmp.ne.s32.totalorder %s49, %s63
    %p65 = scmp.eq.s32.totalorder %s18, 0
    %p66 = por %p64, %p65
    %s68 = sadd.s32 %s67, 1
    %p71 = scmp.eq.s32.totalorder %s12, 1
    %p72 = scmp.ne.s32.totalorder %s67, %s69
    %p73 = scmp.eq.s32.totalorder %s12, 0
    %p74 = por %p72, %p73
    %p75 = scmp.ne.s32.totalorder %s67, %s69
    %p76 = scmp.eq.s32.totalorder %s17, 1
    %p77 = por %p75, %p76
    %p78 = scmp.ne.s32.totalorder %s69, %s70
    %p79 = scmp.eq.s32.totalorder %s17, 0
    %p80 = por %p78, %p79
    %p81 = scmp.ne.s32.totalorder %s69, %s70
    %p82 = scmp.eq.s32.totalorder %s18, 1
    %p83 = por %p81, %p82
    %p85 = scmp.ne.s32.totalorder %s70, %s84
    %p86 = scmp.eq.s32.totalorder %s18, 0
    %p87 = por %p85, %p86
    %s89 = sadd.s32 %s88, 1
    %p92 = scmp.eq.s32.totalorder %s12, 1
    %p93 = scmp.ne.s32.totalorder %s88, %s90
    %p94 = scmp.eq.s32.totalorder %s12, 0
    %p95 = por %p93, %p94
    %p96 = scmp.ne.s32.totalorder %s88, %s90
    %p97 = scmp.eq.s32.totalorder %s17, 1
    %p98 = por %p96, %p97
    %p99 = scmp.ne.s32.totalorder %s90, %s91
    %p100 = scmp.eq.s32.totalorder %s17, 0
    %p101 = por %p99, %p100
    %p102 = scmp.ne.s32.totalorder %s90, %s91
    %p103 = scmp.eq.s32.totalorder %s18, 1
    %p104 = por %p102, %p103
    %p106 = scmp.ne.s32.totalorder %s91, %s105
    %p107 = scmp.eq.s32.totalorder %s18, 0
    %p108 = por %p106, %p107
    %s110 = sadd.s32 %s109, 1
    %p113 = scmp.eq.s32.totalorder %s12, 1
    %p114 = scmp.ne.s32.totalorder %s109, %s111
    %p115 = scmp.eq.s32.totalorder %s12, 0
    %p116 = por %p114, %p115
    %p117 = scmp.ne.s32.totalorder %s109, %s111
    %p118 = scmp.eq.s32.totalorder %s17, 1
    %p119 = por %p117, %p118
    %p120 = scmp.ne.s32.totalorder %s111, %s112
    %p121 = scmp.eq.s32.totalorder %s17, 0
    %p122 = por %p120, %p121
    %p123 = scmp.ne.s32.totalorder %s111, %s112
    %p124 = scmp.eq.s32.totalorder %s18, 1
    %p125 = por %p123, %p124
    %p127 = scmp.ne.s32.totalorder %s112, %s126
    %p128 = scmp.eq.s32.totalorder %s18, 0
    %p129 = por %p127, %p128
    %s131 = sadd.s32 %s130, 1
    %p134 = scmp.eq.s32.totalorder %s12, 1
    %p135 = scmp.ne.s32.totalorder %s130, %s132
    %p136 = scmp.eq.s32.totalorder %s12, 0
    %p137 = por %p135, %p136
    %p138 = scmp.ne.s32.totalorder %s130, %s132
    %p139 = scmp.eq.s32.totalorder %s17, 1
    %p140 = por %p138, %p139
    %p141 = scmp.ne.s32.totalorder %s132, %s133
    %p142 = scmp.eq.s32.totalorder %s17, 0
    %p143 = por %p141, %p142
    %p144 = scmp.ne.s32.totalorder %s132, %s133
    %p145 = scmp.eq.s32.totalorder %s18, 1
    %p146 = por %p144, %p145
    %p148 = scmp.ne.s32.totalorder %s133, %s147
    %p149 = scmp.eq.s32.totalorder %s18, 0
    %p150 = por %p148, %p149
    %s151 = ssub.s32 %s12, %s19
    %p152 = scmp.eq.s32.totalorder %s151, 0
    %s154 = sadd.s32 %s153, 1
    %s155 = scalar_select %p152, %s153, %s154
    %p158 = pneg %p152
    %p159 = scmp.eq.s32.totalorder %s12, 1
    %p160 = por %p158, %p159
    %p161 = scmp.ne.s32.totalorder %s153, %s156
    %p162 = scmp.eq.s32.totalorder %s12, 0
    %p163 = por %p161, %p162
    %p164 = scmp.ne.s32.totalorder %s153, %s156
    %p165 = scmp.eq.s32.totalorder %s17, 1
    %p166 = por %p164, %p165
    %p167 = scmp.ne.s32.totalorder %s156, %s157
    %p168 = scmp.eq.s32.totalorder %s17, 0
    %p169 = por %p167, %p168
    %p170 = scmp.ne.s32.totalorder %s156, %s157
    %p171 = scmp.eq.s32.totalorder %s18, 1
    %p172 = por %p170, %p171
    %p174 = scmp.ne.s32.totalorder %s157, %s173
    %p175 = scmp.eq.s32.totalorder %s18, 0
    %p176 = por %p174, %p175
    %p177 = scmp.le.s32.totalorder 1, %s12
    %p178 = scmp.lt.s32.totalorder %s12, 3
    %p179 = pnand %p177, %p178
    %p180 = pneg %p179
    // Predicated region
    $region9: #{img_classifier_forward.1} parent=5 // pred_check
      _
    $region10: #{img_classifier_forward.1} parent=5 // pred_check_branch
      %182 = sbr.rel (%p179) target = $region12
    $region11: #{img_classifier_forward.1} parent=5 // pred_region
      %s183 = ssub.s32 %s12, 1
      // Predicated region
      $region13: #{img_classifier_forward.1} parent=11 // pred_check
        %p184 = pneg %p59
      $region14: #{img_classifier_forward.1} parent=11 // pred_check_branch
        %186 = sbr.rel (%p184) target = $region16
      $region15: #{img_classifier_forward.1} parent=11 // pred_region
        _
      $region16: #{img_classifier_forward.1} parent=11 // pred_fallthru
        _
      // Predicated region
      $region17: #{img_classifier_forward.1} parent=11 // pred_check
        %p187 = pneg %p80
      $region18: #{img_classifier_forward.1} parent=11 // pred_check_branch
        %189 = sbr.rel (%p187) target = $region20
      $region19: #{img_classifier_forward.1} parent=11 // pred_region
        _
      $region20: #{img_classifier_forward.1} parent=11 // pred_fallthru
        _
      // Predicated region
      $region21: #{img_classifier_forward.1} parent=11 // pred_check
        %p190 = pneg %p101
      $region22: #{img_classifier_forward.1} parent=11 // pred_check_branch
        %192 = sbr.rel (%p190) target = $region24
      $region23: #{img_classifier_forward.1} parent=11 // pred_region
        _
      $region24: #{img_classifier_forward.1} parent=11 // pred_fallthru
        _
      // Predicated region
      $region25: #{img_classifier_forward.1} parent=11 // pred_check
        %p193 = pneg %p122
      $region26: #{img_classifier_forward.1} parent=11 // pred_check_branch
        %195 = sbr.rel (%p193) target = $region28
      $region27: #{img_classifier_forward.1} parent=11 // pred_region
        _
      $region28: #{img_classifier_forward.1} parent=11 // pred_fallthru
        _
      // Predicated region
      $region29: #{img_classifier_forward.1} parent=11 // pred_check
        %p196 = pneg %p143
      $region30: #{img_classifier_forward.1} parent=11 // pred_check_branch
        %198 = sbr.rel (%p196) target = $region32
      $region31: #{img_classifier_forward.1} parent=11 // pred_region
        _
      $region32: #{img_classifier_forward.1} parent=11 // pred_fallthru
        _
    $region12: #{img_classifier_forward.1} parent=5 // pred_fallthru
      _
    %p199 = scmp.lt.s32.totalorder %s12, 2
    // Predicated region
    $region33: #{img_classifier_forward.1} parent=5 // pred_check
      %p200 = pneg %p199
    $region34: #{img_classifier_forward.1} parent=5 // pred_check_branch
      %202 = sbr.rel (%p200) target = $region36
    $region35: #{img_classifier_forward.1} parent=5 // pred_region
      // Predicated region
      $region37: #{img_classifier_forward.1} parent=35 // pred_check
        %p203 = pneg %p32
      $region38: #{img_classifier_forward.1} parent=35 // pred_check_branch
        %205 = sbr.rel (%p203) target = $region40
      $region39: #{img_classifier_forward.1} parent=35 // pred_region
        %p206 = scmp.lt.s32.totalorder %s12, 1
        %s207 = scalar_select %p206, %s12, 1
        %s208 = smul.addr %s207, 3
        %s209 = smul.addr %s208, 2
        %s210 = scalar_lea.vmem %s0, %s209
      $region40: #{img_classifier_forward.1} parent=35 // pred_fallthru
        _
    $region36: #{img_classifier_forward.1} parent=5 // pred_fallthru
      _
    %p211 = scmp.le.s32.totalorder 1, %s12
    %p212 = scmp.lt.s32.totalorder %s12, 3
    %p213 = pnand %p211, %p212
    %p214 = pneg %p213
    // Predicated region
    $region41: #{img_classifier_forward.1} parent=5 // pred_check
      _
    $region42: #{img_classifier_forward.1} parent=5 // pred_check_branch
      %216 = sbr.rel (%p213) target = $region44
    $region43: #{img_classifier_forward.1} parent=5 // pred_region
      %s217 = ssub.s32 %s12, 1
      %p218 = scmp.lt.s32.totalorder %s17, 1
      %s219 = scalar_select %p218, %s17, 1
      %s220 = smul.addr %s219, 3
      %s221 = smul.addr %s220, 2
      %s222 = scalar_lea.vmem %s0, %s221
      %p223 = pneg %p38
      %p224 = pneg %p35
      %p225 = pneg %p59
      %p226 = pneg %p56
      %p227 = pneg %p80
      %p228 = pneg %p77
      %p229 = pneg %p101
      %p230 = pneg %p98
      %p231 = pneg %p122
      %p232 = pneg %p119
      %p233 = pneg %p143
      %p234 = pneg %p140
      %p235 = pneg %p169
      %p236 = pneg %p166
      %p237 = scmp.lt.s32.totalorder %s17, 1
      %s238 = scalar_select %p237, %s17, 1
      %s239 = smul.addr %s238, 2
      %s240 = smul.addr %s239, 8
      %s241 = scalar_lea.vmem %s6, %s240
      %p242 = scmp.lt.s32.totalorder %s17, 1
      %s243 = scalar_select %p242, %s17, 1
      %s244 = smul.addr %s243, 3
      %s245 = smul.addr %s244, 2
      %s246 = scalar_lea.vmem %s0, %s245
      %p247 = scmp.lt.s32.totalorder %s17, 1
      %s248 = scalar_select %p247, %s17, 1
      %s249 = smul.addr %s248, 2
      %s250 = smul.addr %s249, 8
      %s251 = scalar_lea.vmem %s6, %s250
      %v252 = vld [vmem:[%s246] sm:$0x3f]
      %v253 = vunpack.c.l.bf16 %v252
      %v254 = vunpack.c.h.bf16 %v252
      %257 = vst [vmem:[#allocation1] ss:$2 sm:$0xff] %v253
      %s258 = scalar_lea.vmem [#allocation1], 16
      %259 = vst [vmem:[%s258] ss:$2 sm:$0xff] %v254
      %v260 = vld.sshfl [vmem:[#allocation1] sm:$0xff pattern:$0x75316420]
      %v261 = vld.sshfl [vmem:[#allocation1 + $0x8] sm:$0xff pattern:$0x75316420]
      %v262 = vld.sshfl [vmem:[#allocation1 + $0x10] sm:$0xff pattern:$0x75316420]
      %266 = vst [vmem:[#allocation2] sm:$0xf] %v260
      %267 = vst [vmem:[#allocation2 + $0x8] sm:$0xf] %v261
      %vm268 = vcmask 257024
      %269 = vst.msk [vmem:[#allocation2 + $0x10] sm:$0xf] %vm268, %v262
      %v270 = vld [vmem:[%s246] sm:$0x3f]
      %v271 = vunpack.c.l.bf16 %v270
      %v272 = vunpack.c.h.bf16 %v270
      %s275 = scalar_lea.vmem [#allocation1], 1
      %276 = vst [vmem:[%s275] ss:$2 sm:$0xff] %v271
      %s277 = scalar_lea.vmem [#allocation1], 17
      %278 = vst [vmem:[%s277] ss:$2 sm:$0xff] %v272
      %v279 = vld.sshfl [vmem:[#allocation1] sm:$0xff pattern:$0x75316420]
      %v280 = vld.sshfl [vmem:[#allocation1 + $0x8] sm:$0xff pattern:$0x75316420]
      %v281 = vld.sshfl [vmem:[#allocation1 + $0x10] sm:$0xff pattern:$0x75316420]
      %282 = vrot.lane.b32.xlu0 %v279, 127
      %v283 = vpop.permute.xlu0 %282
      %284 = vrot.lane.b32.xlu0 %v280, 127
      %v285 = vpop.permute.xlu0 %284
      %286 = vrot.lane.b32.xlu0 %v281, 127
      %v287 = vpop.permute.xlu0 %286
      %vm288 = vcmask 1039360
      %v289 = vsel %vm288, %v283, %v285
      %v290 = vsel %vm288, %v285, %v287
      %294 = vst [vmem:[#allocation2] sm:$0xf0] %v289
      %295 = vst [vmem:[#allocation2 + $0x8] sm:$0xf0] %v290
      %vm296 = vcmask 261124
      %297 = vst.msk [vmem:[#allocation2 + $0x10] sm:$0xf0] %vm296, %v287
      %v298 = vld [vmem:[%s246] sm:$0x3f]
      %v299 = vunpack.c.l.bf16 %v298
      %v300 = vunpack.c.h.bf16 %v298
      %303 = vst [vmem:[#allocation1] ss:$2 sm:$0xff] %v299
      %s304 = scalar_lea.vmem [#allocation1], 16
      %305 = vst [vmem:[%s304] ss:$2 sm:$0xff] %v300
      %v306 = vld.sshfl [vmem:[#allocation1] sm:$0xff pattern:$0x75316420]
      %v307 = vld.sshfl [vmem:[#allocation1 + $0x8] sm:$0xff pattern:$0x75316420]
      %v308 = vld.sshfl [vmem:[#allocation1 + $0x10] sm:$0xff pattern:$0x75316420]
      %309 = vrot.lane.b32.xlu0 %v306, 126
      %v310 = vpop.permute.xlu0 %309
      %311 = vrot.lane.b32.xlu0 %v307, 126
      %v312 = vpop.permute.xlu0 %311
      %313 = vrot.lane.b32.xlu0 %v308, 126
      %v314 = vpop.permute.xlu0 %313
      %vm315 = vcmask 1031168
      %v316 = vsel %vm315, %v310, %v312
      %v317 = vsel %vm315, %v312, %v314
      %321 = vst [vmem:[#allocation2 + $0x18] sm:$0xf] %v316
      %322 = vst [vmem:[#allocation2 + $0x20] sm:$0xf] %v317
      %323 = vst.msk [vmem:[#allocation2 + $0x28] sm:$0xf] %vm268, %v314
      %v324 = vld [vmem:[%s246] sm:$0x3f]
      %v325 = vunpack.c.l.bf16 %v324
      %v326 = vunpack.c.h.bf16 %v324
      %s329 = scalar_lea.vmem [#allocation1], 1
      %330 = vst [vmem:[%s329] ss:$2 sm:$0xff] %v325
      %s331 = scalar_lea.vmem [#allocation1], 17
      %332 = vst [vmem:[%s331] ss:$2 sm:$0xff] %v326
      %v333 = vld.sshfl [vmem:[#allocation1] sm:$0xff pattern:$0x75316420]
      %v334 = vld.sshfl [vmem:[#allocation1 + $0x8] sm:$0xff pattern:$0x75316420]
      %v335 = vld.sshfl [vmem:[#allocation1 + $0x10] sm:$0xff pattern:$0x75316420]
      %336 = vrot.lane.b32.xlu0 %v333, 110
      %v337 = vpop.permute.xlu0 %336
      %338 = vrot.lane.b32.xlu0 %v334, 110
      %v339 = vpop.permute.xlu0 %338
      %340 = vrot.lane.b32.xlu0 %v335, 110
      %v341 = vpop.permute.xlu0 %340
      %vm342 = vcmask 900096
      %v343 = vsel %vm342, %v337, %v339
      %v344 = vsel %vm342, %v339, %v341
      %348 = vst [vmem:[#allocation2 + $0x18] sm:$0xf0] %v343
      %349 = vst [vmem:[#allocation2 + $0x20] sm:$0xf0] %v344
      %350 = vst.msk [vmem:[#allocation2 + $0x28] sm:$0xf0] %vm296, %v341
      %v351 = vld [vmem:[%s246] sm:$0x3f]
      %v352 = vunpack.c.l.bf16 %v351
      %v353 = vunpack.c.h.bf16 %v351
      %356 = vst [vmem:[#allocation1] ss:$2 sm:$0xff] %v352
      %s357 = scalar_lea.vmem [#allocation1], 16
      %358 = vst [vmem:[%s357] ss:$2 sm:$0xff] %v353
      %v359 = vld.sshfl [vmem:[#allocation1] sm:$0xff pattern:$0x75316420]
      %v360 = vld.sshfl [vmem:[#allocation1 + $0x8] sm:$0xff pattern:$0x75316420]
      %v361 = vld.sshfl [vmem:[#allocation1 + $0x10] sm:$0xff pattern:$0x75316420]
      %362 = vrot.lane.b32.xlu0 %v359, 109
      %v363 = vpop.permute.xlu0 %362
      %364 = vrot.lane.b32.xlu0 %v360, 109
      %v365 = vpop.permute.xlu0 %364
      %366 = vrot.lane.b32.xlu0 %v361, 109
      %v367 = vpop.permute.xlu0 %366
      %vm368 = vcmask 891904
      %v369 = vsel %vm368, %v363, %v365
      %v370 = vsel %vm368, %v365, %v367
      %374 = vst [vmem:[#allocation2 + $0x30] sm:$0xf] %v369
      %375 = vst [vmem:[#allocation2 + $0x38] sm:$0xf] %v370
      %376 = vst.msk [vmem:[#allocation2 + $0x40] sm:$0xf] %vm268, %v367
      %v377 = vld [vmem:[%s246] sm:$0x3f]
      %v378 = vunpack.c.l.bf16 %v377
      %v379 = vunpack.c.h.bf16 %v377
      %s382 = scalar_lea.vmem [#allocation1], 1
      %383 = vst [vmem:[%s382] ss:$2 sm:$0xff] %v378
      %s384 = scalar_lea.vmem [#allocation1], 17
      %385 = vst [vmem:[%s384] ss:$2 sm:$0xff] %v379
      %v386 = vld.sshfl [vmem:[#allocation1] sm:$0xff pattern:$0x75316420]
      %v387 = vld.sshfl [vmem:[#allocation1 + $0x8] sm:$0xff pattern:$0x75316420]
      %v388 = vld.sshfl [vmem:[#allocation1 + $0x10] sm:$0xff pattern:$0x75316420]
      %389 = vrot.lane.b32.xlu0 %v386, 108
      %v390 = vpop.permute.xlu0 %389
      %391 = vrot.lane.b32.xlu0 %v387, 108
      %v392 = vpop.permute.xlu0 %391
      %393 = vrot.lane.b32.xlu0 %v388, 108
      %v394 = vpop.permute.xlu0 %393
      %vm395 = vcmask 883712
      %v396 = vsel %vm395, %v390, %v392
      %v397 = vsel %vm395, %v392, %v394
      %401 = vst [vmem:[#allocation2 + $0x30] sm:$0xf0] %v396
      %402 = vst [vmem:[#allocation2 + $0x38] sm:$0xf0] %v397
      %403 = vst.msk [vmem:[#allocation2 + $0x40] sm:$0xf0] %vm296, %v394
      %v404 = vld [vmem:[%s246] sm:$0x3f]
      %v405 = vunpack.c.l.bf16 %v404
      %v406 = vunpack.c.h.bf16 %v404
      %409 = vst [vmem:[#allocation1] ss:$2 sm:$0xff] %v405
      %s410 = scalar_lea.vmem [#allocation1], 16
      %411 = vst [vmem:[%s410] ss:$2 sm:$0xff] %v406
      %v412 = vld.sshfl [vmem:[#allocation1] sm:$0xff pattern:$0x75316420]
      %v413 = vld.sshfl [vmem:[#allocation1 + $0x8] sm:$0xff pattern:$0x75316420]
      %v414 = vld.sshfl [vmem:[#allocation1 + $0x10] sm:$0xff pattern:$0x75316420]
      %415 = vrot.lane.b32.xlu0 %v412, 92
      %v416 = vpop.permute.xlu0 %415
      %417 = vrot.lane.b32.xlu0 %v413, 92
      %v418 = vpop.permute.xlu0 %417
      %419 = vrot.lane.b32.xlu0 %v414, 92
      %v420 = vpop.permute.xlu0 %419
      %vm421 = vcmask 752640
      %v422 = vsel %vm421, %v416, %v418
      %v423 = vsel %vm421, %v418, %v420
      %427 = vst [vmem:[#allocation2 + $0x48] sm:$0xf] %v422
      %428 = vst [vmem:[#allocation2 + $0x50] sm:$0xf] %v423
      %429 = vst.msk [vmem:[#allocation2 + $0x58] sm:$0xf] %vm268, %v420
      %v430 = vld [vmem:[%s246] sm:$0x3f]
      %v431 = vunpack.c.l.bf16 %v430
      %v432 = vunpack.c.h.bf16 %v430
      %s435 = scalar_lea.vmem [#allocation1], 1
      %436 = vst [vmem:[%s435] ss:$2 sm:$0xff] %v431
      %s437 = scalar_lea.vmem [#allocation1], 17
      %438 = vst [vmem:[%s437] ss:$2 sm:$0xff] %v432
      %v439 = vld.sshfl [vmem:[#allocation1] sm:$0xff pattern:$0x75316420]
      %v440 = vld.sshfl [vmem:[#allocation1 + $0x8] sm:$0xff pattern:$0x75316420]
      %v441 = vld.sshfl [vmem:[#allocation1 + $0x10] sm:$0xff pattern:$0x75316420]
      %442 = vrot.lane.b32.xlu0 %v439, 91
      %v443 = vpop.permute.xlu0 %442
      %444 = vrot.lane.b32.xlu0 %v440, 91
      %v445 = vpop.permute.xlu0 %444
      %446 = vrot.lane.b32.xlu0 %v441, 91
      %v447 = vpop.permute.xlu0 %446
      %vm448 = vcmask 744448
      %v449 = vsel %vm448, %v443, %v445
      %v450 = vsel %vm448, %v445, %v447
      %454 = vst [vmem:[#allocation2 + $0x48] sm:$0xf0] %v449
      %455 = vst [vmem:[#allocation2 + $0x50] sm:$0xf0] %v450
      %456 = vst.msk [vmem:[#allocation2 + $0x58] sm:$0xf0] %vm296, %v447
      %v457 = vld [vmem:[%s246] sm:$0x3f]
      %v458 = vunpack.c.l.bf16 %v457
      %v459 = vunpack.c.h.bf16 %v457
      %462 = vst [vmem:[#allocation1] ss:$2 sm:$0xff] %v458
      %s463 = scalar_lea.vmem [#allocation1], 16
      %464 = vst [vmem:[%s463] ss:$2 sm:$0xff] %v459
      %v465 = vld.sshfl [vmem:[#allocation1] sm:$0xff pattern:$0x75316420]
      %v466 = vld.sshfl [vmem:[#allocation1 + $0x8] sm:$0xff pattern:$0x75316420]
      %v467 = vld.sshfl [vmem:[#allocation1 + $0x10] sm:$0xff pattern:$0x75316420]
      %468 = vrot.lane.b32.xlu0 %v465, 90
      %v469 = vpop.permute.xlu0 %468
      %470 = vrot.lane.b32.xlu0 %v466, 90
      %v471 = vpop.permute.xlu0 %470
      %472 = vrot.lane.b32.xlu0 %v467, 90
      %v473 = vpop.permute.xlu0 %472
      %vm474 = vcmask 736256
      %v475 = vsel %vm474, %v469, %v471
      %v476 = vsel %vm474, %v471, %v473
      %480 = vst [vmem:[#allocation2 + $0x60] sm:$0xf] %v475
      %481 = vst [vmem:[#allocation2 + $0x68] sm:$0xf] %v476
      %482 = vst.msk [vmem:[#allocation2 + $0x70] sm:$0xf] %vm268, %v473
      %v483 = vld [vmem:[%s1] sm:$0xff]
      %v484 = vld [vmem:[%s1 + $0x8] sm:$0xff]
      %v485 = vld [vmem:[%s1 + $0x10] sm:$0xff]
      %v486 = vld [vmem:[%s1 + $0x18] sm:$0xff]
      %v487 = vld [vmem:[#allocation2] sm:$0xff]
      %v488 = vld [vmem:[#allocation2 + $0x8] sm:$0xff]
      %v489 = vld [vmem:[#allocation2 + $0x10] sm:$0xff]
      %v490 = vld [vmem:[#allocation2 + $0x18] sm:$0xff]
      %v491 = vld [vmem:[#allocation2 + $0x20] sm:$0xff]
      %v492 = vld [vmem:[#allocation2 + $0x28] sm:$0xff]
      %v493 = vld [vmem:[#allocation2 + $0x30] sm:$0xff]
      %v494 = vld [vmem:[#allocation2 + $0x38] sm:$0xff]
      %v495 = vld [vmem:[#allocation2 + $0x40] sm:$0xff]
      %v496 = vld [vmem:[#allocation2 + $0x48] sm:$0xff]
      %v497 = vld [vmem:[#allocation2 + $0x50] sm:$0xff]
      %v498 = vld [vmem:[#allocation2 + $0x58] sm:$0xff]
      %v499 = vld [vmem:[#allocation2 + $0x60] sm:$0xf]
      %v500 = vld [vmem:[#allocation2 + $0x68] sm:$0xf]
      %v501 = vld [vmem:[#allocation2 + $0x70] sm:$0xf]
      %v502 = vld [vmem:[%s2] sm:$0xff]
      %v503 = vld [vmem:[%s2 + $0x8] sm:$0xff]
      %v504 = vld [vmem:[%s2 + $0x10] sm:$0xff]
      %v505 = vld [vmem:[%s2 + $0x18] sm:$0xff]
      %507 = vset.pattern.permute.xlu0 0
      %508 = vperm.xlu0 %507, %v502
      %v509 = vpop.permute.xlu0 %508
      %512 = vset.pattern.permute.xlu0 0
      %513 = vperm.xlu0 %512, %v503
      %v514 = vpop.permute.xlu0 %513
      %517 = vset.pattern.permute.xlu0 0
      %518 = vperm.xlu0 %517, %v504
      %v519 = vpop.permute.xlu0 %518
      %522 = vset.pattern.permute.xlu0 0
      %523 = vperm.xlu0 %522, %v505
      %v524 = vpop.permute.xlu0 %523
      %vm526 = vcmask 293888
      %v528 = vsel %vm526, %v483, 0
      %v531 = vsel %vm526, %v484, 0
      %v534 = vsel %vm526, %v485, 0
      %v537 = vsel %vm526, %v486, 0
      %vm539 = vcmask 1043456
      %v541 = vsel %vm539, %v499, 0
      %v544 = vsel %vm539, %v500, 0
      %v547 = vsel %vm539, %v501, 0
      %549 = vmatpush.msra.mxu0 0.0
      %550 = vmatpush.msra.mxu0 0.0
      %551 = vmatpush.msra.mxu0 0.0
      %552 = vmatpush.msra.mxu0 0.0
      %553 = vmatpush.msra.mxu0 0.0
      %554 = vmatpush.msra.mxu0 0.0
      %555 = vmatpush.msra.mxu0 0.0
      %556 = vmatpush.msra.mxu0 0.0
      %557 = vmatpush.msra.mxu0 0.0
      %558 = vmatpush.msra.mxu0 0.0
      %559 = vmatpush.msra.mxu0 0.0
      %560 = vmatpush.msra.mxu0 %v541
      %561 = vmatpush.msra.mxu0 %v496
      %562 = vmatpush.msra.mxu0 %v493
      %563 = vmatpush.msra.mxu0 %v490
      %564 = vmatpush.msra.mxu0 %v487
      %565 = vmatmul.f32.gmra.mxu0 %v528
      %v566 = vpop.f32.mrf.mxu0
      %v567 = vadd.f32 %v509, %v566
      %568 = vmatmul.f32.gmra.mxu0 %v531
      %v569 = vpop.f32.mrf.mxu0
      %v570 = vadd.f32 %v514, %v569
      %571 = vmatmul.f32.gmra.mxu0 %v534
      %v572 = vpop.f32.mrf.mxu0
      %v573 = vadd.f32 %v519, %v572
      %574 = vmatmul.f32.gmra.mxu0 %v537
      %v575 = vpop.f32.mrf.mxu0
      %v576 = vadd.f32 %v524, %v575
      %577 = vdwg.mxu0
      %578 = vmatpush.msra.mxu0 0.0
      %579 = vmatpush.msra.mxu0 0.0
      %580 = vmatpush.msra.mxu0 0.0
      %581 = vmatpush.msra.mxu0 0.0
      %582 = vmatpush.msra.mxu0 0.0
      %583 = vmatpush.msra.mxu0 0.0
      %584 = vmatpush.msra.mxu0 0.0
      %585 = vmatpush.msra.mxu0 0.0
      %586 = vmatpush.msra.mxu0 0.0
      %587 = vmatpush.msra.mxu0 0.0
      %588 = vmatpush.msra.mxu0 0.0
      %589 = vmatpush.msra.mxu0 %v544
      %590 = vmatpush.msra.mxu0 %v497
      %591 = vmatpush.msra.mxu0 %v494
      %592 = vmatpush.msra.mxu0 %v491
      %593 = vmatpush.msra.mxu0 %v488
      %594 = vmatmul.f32.gmra.mxu0 %v528
      %v595 = vpop.f32.mrf.mxu0
      %v596 = vadd.f32 %v509, %v595
      %597 = vmatmul.f32.gmra.mxu0 %v531
      %v598 = vpop.f32.mrf.mxu0
      %v599 = vadd.f32 %v514, %v598
      %600 = vmatmul.f32.gmra.mxu0 %v534
      %v601 = vpop.f32.mrf.mxu0
      %v602 = vadd.f32 %v519, %v601
      %603 = vmatmul.f32.gmra.mxu0 %v537
      %v604 = vpop.f32.mrf.mxu0
      %v605 = vadd.f32 %v524, %v604
      %606 = vdwg.mxu0
      %607 = vmatpush.msra.mxu0 0.0
      %608 = vmatpush.msra.mxu0 0.0
      %609 = vmatpush.msra.mxu0 0.0
      %610 = vmatpush.msra.mxu0 0.0
      %611 = vmatpush.msra.mxu0 0.0
      %612 = vmatpush.msra.mxu0 0.0
      %613 = vmatpush.msra.mxu0 0.0
      %614 = vmatpush.msra.mxu0 0.0
      %615 = vmatpush.msra.mxu0 0.0
      %616 = vmatpush.msra.mxu0 0.0
      %617 = vmatpush.msra.mxu0 0.0
      %618 = vmatpush.msra.mxu0 %v547
      %619 = vmatpush.msra.mxu0 %v498
      %620 = vmatpush.msra.mxu0 %v495
      %621 = vmatpush.msra.mxu0 %v492
      %622 = vmatpush.msra.mxu0 %v489
      %623 = vmatmul.f32.gmra.mxu0 %v528
      %v624 = vpop.f32.mrf.mxu0
      %v625 = vadd.f32 %v509, %v624
      %626 = vmatmul.f32.gmra.mxu0 %v531
      %v627 = vpop.f32.mrf.mxu0
      %v628 = vadd.f32 %v514, %v627
      %629 = vmatmul.f32.gmra.mxu0 %v534
      %v630 = vpop.f32.mrf.mxu0
      %v631 = vadd.f32 %v519, %v630
      %632 = vmatmul.f32.gmra.mxu0 %v537
      %v633 = vpop.f32.mrf.mxu0
      %v634 = vadd.f32 %v524, %v633
      %635 = vdwg.mxu0
      %v636 = vmax.f32 %v567, 0.0
      %v637 = vmax.f32 %v596, 0.0
      %v638 = vmax.f32 %v625, 0.0
      %v639 = vmax.f32 %v570, 0.0
      %v640 = vmax.f32 %v599, 0.0
      %v641 = vmax.f32 %v628, 0.0
      %v642 = vmax.f32 %v573, 0.0
      %v643 = vmax.f32 %v602, 0.0
      %v644 = vmax.f32 %v631, 0.0
      %v645 = vmax.f32 %v576, 0.0
      %v646 = vmax.f32 %v605, 0.0
      %v647 = vmax.f32 %v634, 0.0
      %v648 = vld [vmem:[%s3] sm:$0x7]
      %v650 = vperm.slane %v648, 0
      %v651 = vperm.slane %v648, 1
      %v652 = vperm.slane %v648, 2
      %v656 = vmul.f32 %v636, %v650
      %v657 = vmul.f32 %v637, %v651
      %v658 = vmul.f32 %v638, %v652
      %v659 = vmul.f32 %v639, %v650
      %v660 = vmul.f32 %v640, %v651
      %v661 = vmul.f32 %v641, %v652
      %v662 = vmul.f32 %v642, %v650
      %v663 = vmul.f32 %v643, %v651
      %v664 = vmul.f32 %v644, %v652
      %v665 = vmul.f32 %v645, %v650
      %v666 = vmul.f32 %v646, %v651
      %v667 = vmul.f32 %v647, %v652
      %v668 = vadd.f32 %v656, %v657
      %vm669 = vcmask 261120
      %v670 = vsel %vm669, %v658, 0.0
      %v671 = vadd.f32 %v668, %v670
      %672 = vadd.xlane.f32.xlu0 %v671
      %v673 = vpop.xlane.xlu0 %672
      %v674 = vadd.f32 %v659, %v660
      %v675 = vsel %vm669, %v661, 0.0
      %v676 = vadd.f32 %v674, %v675
      %677 = vadd.xlane.f32.xlu0 %v676
      %v678 = vpop.xlane.xlu0 %677
      %v679 = vadd.f32 %v662, %v663
      %v680 = vsel %vm669, %v664, 0.0
      %v681 = vadd.f32 %v679, %v680
      %682 = vadd.xlane.f32.xlu0 %v681
      %v683 = vpop.xlane.xlu0 %682
      %v684 = vadd.f32 %v665, %v666
      %v685 = vsel %vm669, %v667, 0.0
      %v686 = vadd.f32 %v684, %v685
      %687 = vadd.xlane.f32.xlu0 %v686
      %v688 = vpop.xlane.xlu0 %687
      %v689 = vld [vmem:[%s4] sm:$0xff]
      %v690 = vld [vmem:[%s4 + $0x8] sm:$0xff]
      %v691 = vld [vmem:[%s5] sm:$0xff]
      %v692 = vld [vmem:[%s5 + $0x8] sm:$0xff]
      %v694 = vsel %vm669, %v689, 0
      %v697 = vsel %vm669, %v690, 0
      %699 = vmatpush.msra.mxu0 0.0
      %700 = vmatpush.msra.mxu0 0.0
      %701 = vmatpush.msra.mxu0 0.0
      %702 = vmatpush.msra.mxu0 0.0
      %703 = vmatpush.msra.mxu0 0.0
      %704 = vmatpush.msra.mxu0 0.0
      %705 = vmatpush.msra.mxu0 0.0
      %706 = vmatpush.msra.mxu0 0.0
      %707 = vmatpush.msra.mxu0 0.0
      %708 = vmatpush.msra.mxu0 0.0
      %709 = vmatpush.msra.mxu0 0.0
      %710 = vmatpush.msra.mxu0 0.0
      %711 = vmatpush.msra.mxu0 %v688
      %712 = vmatpush.msra.mxu0 %v683
      %713 = vmatpush.msra.mxu0 %v678
      %714 = vmatpush.msra.mxu0 %v673
      %715 = vmatmul.f32.gmra.mxu0 %v694
      %v716 = vpop.f32.mrf.mxu0
      %v717 = vadd.f32 %v691, %v716
      %718 = vmatmul.f32.gmra.mxu0 %v697
      %v719 = vpop.f32.mrf.mxu0
      %v720 = vadd.f32 %v692, %v719
      %721 = vdwg.mxu0
      %vm722 = vcmask 7168
      %723 = vst.msk [vmem:[%s251] sm:$0xff] %vm722, %v717
      %724 = vst.msk [vmem:[%s251 + $0x8] sm:$0xff] %vm722, %v720
      %p725 = scmp.lt.s32.totalorder %s17, 1
      %s726 = scalar_select %p725, %s17, 1
      %s727 = smul.addr %s726, 2
      %s728 = smul.addr %s727, 8
      %s729 = scalar_lea.vmem %s6, %s728
      // Predicated region
      $region45: #{img_classifier_forward.1} parent=43 // pred_check
        %p730 = pneg %p166
      $region46: #{img_classifier_forward.1} parent=43 // pred_check_branch
        %732 = sbr.rel (%p730) target = $region48
      $region47: #{img_classifier_forward.1} parent=43 // pred_region
        _
      $region48: #{img_classifier_forward.1} parent=43 // pred_fallthru
        _
    $region44: #{img_classifier_forward.1} parent=5 // pred_fallthru
      _
    %p733 = scmp.le.s32.totalorder 2, %s12
    // Predicated region
    $region49: #{img_classifier_forward.1} parent=5 // pred_check
      %p734 = pneg %p733
    $region50: #{img_classifier_forward.1} parent=5 // pred_check_branch
      %736 = sbr.rel (%p734) target = $region52
    $region51: #{img_classifier_forward.1} parent=5 // pred_region
      %s737 = ssub.s32 %s12, 2
      // Predicated region
      $region53: #{img_classifier_forward.1} parent=51 // pred_check
        %p738 = pneg %p172
      $region54: #{img_classifier_forward.1} parent=51 // pred_check_branch
        %740 = sbr.rel (%p738) target = $region56
      $region55: #{img_classifier_forward.1} parent=51 // pred_region
        %p741 = scmp.lt.s32.totalorder %s18, 1
        %s742 = scalar_select %p741, %s18, 1
        %s743 = smul.addr %s742, 2
        %s744 = smul.addr %s743, 8
        %s745 = scalar_lea.vmem %s6, %s744
      $region56: #{img_classifier_forward.1} parent=51 // pred_fallthru
        _
    $region52: #{img_classifier_forward.1} parent=5 // pred_fallthru
      _
  $region6: #{img_classifier_forward.1} parent=0 // loop_footer
    %s16 = sadd.s32 1, %s12
  $region7: #{img_classifier_forward.1} parent=0 // loop_footer_branch
    %11 = sbr.rel target = $region3
  $region8: #{img_classifier_forward.1} parent=0 // loop_exit
    _

</llo_original>
